<compile_context>
chip_gen: v7x
topology: tpu7x:2x2x1
jax: 0.10.0
libtpu: 0.0.40
codegen_flags: <defaults>
</compile_context>

<pallas_src>
import functools
import math

import jax
import jax.numpy as jnp
from jax import lax
from jax.experimental import pallas as pl
from jax.experimental.pallas import tpu as pltpu

_INV_SQRT2 = 1.0 / math.sqrt(2.0)


def _ffn_kernel(x_ref, w1_ref, b1_ref, w2_ref, b2_ref, gamma_ref, beta_ref,
                o_ref, *, eps):
    # One load of the (TM, D) activation block; everything downstream reuses it.
    x = x_ref[...].astype(jnp.float32)                       # residual, f32
    # --- pre LayerNorm over the channel (lane) dim ---
    mean = jnp.mean(x, axis=-1, keepdims=True)
    var = jnp.mean((x - mean) ** 2, axis=-1, keepdims=True)
    xn = (x - mean) * lax.rsqrt(var + eps)
    xn = xn * gamma_ref[...].astype(jnp.float32) + beta_ref[...].astype(jnp.float32)
    # --- fc1: MXU matmul at the weights' native dtype, f32 accumulation ---
    h = jnp.dot(xn.astype(w1_ref.dtype), w1_ref[...],
                preferred_element_type=jnp.float32)
    h = h + b1_ref[...].astype(jnp.float32)
    # exact GELU (erf form) to match torch.nn.GELU() default
    h = 0.5 * h * (1.0 + lax.erf(h * _INV_SQRT2))
    # --- fc2 ---
    out = jnp.dot(h.astype(w2_ref.dtype), w2_ref[...],
                  preferred_element_type=jnp.float32)
    out = out + b2_ref[...].astype(jnp.float32)
    # --- residual add (dropout layers are identity in eval / p=0) ---
    o_ref[...] = (out + x).astype(o_ref.dtype)


def positionwise_ffn(x, w1, b1, w2, b2, gamma, beta, *, eps=1e-5, block_m=512):
    """x: (B, S, D). w1: (D, H), b1: (1, H), w2: (H, D), b2: (1, D),
    gamma/beta: (1, D). Returns (B, S, D)."""
    B, S, D = x.shape
    H = w1.shape[1]
    M = B * S
    x2d = x.reshape(M, D)

    # Token tile: multiple of 8 sublanes, capped by block_m; pad M up to a
    # multiple of the tile (padded zero-rows are harmless through LN/GELU and
    # are sliced off afterwards).
    tm = min(block_m, M)
    tm = max(8, ((tm + 7) // 8) * 8)
    num_blocks = pl.cdiv(M, tm)
    m_pad = num_blocks * tm
    if m_pad != M:
        x2d = jnp.pad(x2d, ((0, m_pad - M), (0, 0)))

    x_bytes = jnp.dtype(x.dtype).itemsize
    w_bytes = jnp.dtype(w1.dtype).itemsize
    cost = pl.CostEstimate(
        flops=4 * m_pad * D * H,                 # fc1 + fc2
        transcendentals=m_pad * H,               # erf in GELU
        bytes_accessed=2 * m_pad * D * x_bytes + 2 * D * H * w_bytes,
    )

    kernel = functools.partial(_ffn_kernel, eps=eps)
    out2d = pl.pallas_call(
        kernel,
        out_shape=jax.ShapeDtypeStruct((m_pad, D), x.dtype),
        grid_spec=pltpu.PrefetchScalarGridSpec(
            num_scalar_prefetch=0,
            grid=(num_blocks,),
            in_specs=[
                pl.BlockSpec((tm, D), lambda i: (i, 0)),   # x   (streamed)
                pl.BlockSpec((D, H), lambda i: (0, 0)),    # w1  (resident)
                pl.BlockSpec((1, H), lambda i: (0, 0)),    # b1  (resident)
                pl.BlockSpec((H, D), lambda i: (0, 0)),    # w2  (resident)
                pl.BlockSpec((1, D), lambda i: (0, 0)),    # b2  (resident)
                pl.BlockSpec((1, D), lambda i: (0, 0)),    # gamma
                pl.BlockSpec((1, D), lambda i: (0, 0)),    # beta
            ],
            out_specs=pl.BlockSpec((tm, D), lambda i: (i, 0)),
        ),
        compiler_params=pltpu.CompilerParams(
            dimension_semantics=("parallel",)),   # M-blocks independent -> megacore
        cost_estimate=cost,
    )(x2d, w1, b1, w2, b2, gamma, beta)

    if m_pad != M:
        out2d = out2d[:M]
    return out2d.reshape(B, S, D)


def _xavier_uniform(key, fan_in, fan_out, dtype=jnp.float32):
    # torch.nn.init.xavier_uniform_ on weight of shape (fan_out, fan_in);
    # we build the (fan_in, fan_out) transpose directly (same distribution).
    bound = math.sqrt(6.0 / (fan_in + fan_out))
    return jax.random.uniform(key, (fan_in, fan_out), dtype,
                              minval=-bound, maxval=bound)


if __name__ == "__main__":
    # args: GNNs_hidden_dim=64, GNNs_MLP_hidden=128, GNNs_activation_fn='gelu',
    #       GNNs_pre_norm=True, GNNs_gated_proj=False, GNNs_dropout=0.0,
    #       GNNs_layernorm_eps=1e-5
    B, S, D, H = 2, 8, 64, 128
    eps = 1e-5

    key = jax.random.PRNGKey(0)
    kx, k1, k2 = jax.random.split(key, 3)

    x = jax.random.normal(kx, (B, S, D), jnp.float32)
    w1 = _xavier_uniform(k1, D, H)          # ffn_1 weight (in, out)
    b1 = jnp.zeros((1, H), jnp.float32)     # ffn_1 bias (zeros per init_weights)
    w2 = _xavier_uniform(k2, H, D)          # ffn_2 weight (in, out)
    b2 = jnp.zeros((1, D), jnp.float32)
    gamma = jnp.ones((1, D), jnp.float32)   # LayerNorm weight
    beta = jnp.zeros((1, D), jnp.float32)   # LayerNorm bias

    out = positionwise_ffn(x, w1, b1, w2, b2, gamma, beta, eps=eps)
    jax.block_until_ready(out)

    # pure-JAX reference for sanity
    xn = (x - x.mean(-1, keepdims=True)) / jnp.sqrt(x.var(-1, keepdims=True) + eps)
    xn = xn * gamma[0] + beta[0]
    h = xn @ w1 + b1[0]
    h = 0.5 * h * (1.0 + lax.erf(h / math.sqrt(2.0)))
    ref = h @ w2 + b2[0] + x
    assert jnp.allclose(out, ref, atol=1e-4, rtol=1e-4), "mismatch vs reference"

    print("KERNEL_OK")
</pallas_src>

<mosaic_0001>
module attributes {stable_mosaic.version = 11 : i64} {
  func.func @_ffn_kernel(%arg0: i32, %arg1: memref<16x64xf32, #tpu.memory_space<vmem>>, %arg2: memref<64x128xf32, #tpu.memory_space<vmem>>, %arg3: memref<1x128xf32, #tpu.memory_space<vmem>>, %arg4: memref<128x64xf32, #tpu.memory_space<vmem>>, %arg5: memref<1x64xf32, #tpu.memory_space<vmem>>, %arg6: memref<1x64xf32, #tpu.memory_space<vmem>>, %arg7: memref<1x64xf32, #tpu.memory_space<vmem>>, %arg8: memref<16x64xf32, #tpu.memory_space<vmem>>) attributes {dimension_semantics = [#tpu.dimension_semantics<parallel>], iteration_bounds = array<i64: 1>, scalar_prefetch = 0 : i64, scratch_operands = 0 : i64, tpu.core_type = #tpu.core_type<tc>, window_params = [{transform_indices = @transform_0, window_bounds = array<i64: 16, 64>}, {pipeline_mode = #tpu.pipeline_mode<synchronous>, transform_indices = @transform_1, window_bounds = array<i64: 64, 128>}, {pipeline_mode = #tpu.pipeline_mode<synchronous>, transform_indices = @transform_2, window_bounds = array<i64: 1, 128>}, {pipeline_mode = #tpu.pipeline_mode<synchronous>, transform_indices = @transform_3, window_bounds = array<i64: 128, 64>}, {pipeline_mode = #tpu.pipeline_mode<synchronous>, transform_indices = @transform_4, window_bounds = array<i64: 1, 64>}, {pipeline_mode = #tpu.pipeline_mode<synchronous>, transform_indices = @transform_5, window_bounds = array<i64: 1, 64>}, {pipeline_mode = #tpu.pipeline_mode<synchronous>, transform_indices = @transform_6, window_bounds = array<i64: 1, 64>}, {transform_indices = @transform_7, window_bounds = array<i64: 16, 64>}]} {
    %c0 = arith.constant 0 : index
    %c0_0 = arith.constant 0 : index
    %0 = vector.load %arg1[%c0, %c0_0] : memref<16x64xf32, #tpu.memory_space<vmem>>, vector<16x64xf32>
    %cst = arith.constant dense<0.000000e+00> : vector<16xf32>
    %1 = vector.multi_reduction <add>, %0, %cst [1] : vector<16x64xf32> to vector<16xf32>
    %2 = vector.shape_cast %1 : vector<16xf32> to vector<16x1xf32>
    %cst_1 = arith.constant 6.400000e+01 : f32
    %3 = vector.broadcast %cst_1 : f32 to vector<16x1xf32>
    %4 = arith.divf %2, %3 : vector<16x1xf32>
    %5 = vector.broadcast %4 : vector<16x1xf32> to vector<16x64xf32>
    %6 = arith.subf %0, %5 : vector<16x64xf32>
    %7 = arith.mulf %6, %6 : vector<16x64xf32>
    %cst_2 = arith.constant dense<0.000000e+00> : vector<16xf32>
    %8 = vector.multi_reduction <add>, %7, %cst_2 [1] : vector<16x64xf32> to vector<16xf32>
    %9 = vector.shape_cast %8 : vector<16xf32> to vector<16x1xf32>
    %cst_3 = arith.constant 6.400000e+01 : f32
    %10 = vector.broadcast %cst_3 : f32 to vector<16x1xf32>
    %11 = arith.divf %9, %10 : vector<16x1xf32>
    %12 = vector.broadcast %4 : vector<16x1xf32> to vector<16x64xf32>
    %13 = arith.subf %0, %12 : vector<16x64xf32>
    %cst_4 = arith.constant 9.99999974E-6 : f32
    %14 = vector.broadcast %cst_4 : f32 to vector<16x1xf32>
    %15 = arith.addf %11, %14 : vector<16x1xf32>
    %16 = math.rsqrt %15 : vector<16x1xf32>
    %17 = vector.broadcast %16 : vector<16x1xf32> to vector<16x64xf32>
    %18 = arith.mulf %13, %17 : vector<16x64xf32>
    %c0_5 = arith.constant 0 : index
    %c0_6 = arith.constant 0 : index
    %19 = vector.load %arg6[%c0_5, %c0_6] : memref<1x64xf32, #tpu.memory_space<vmem>>, vector<1x64xf32>
    %20 = vector.broadcast %19 : vector<1x64xf32> to vector<16x64xf32>
    %21 = arith.mulf %18, %20 : vector<16x64xf32>
    %c0_7 = arith.constant 0 : index
    %c0_8 = arith.constant 0 : index
    %22 = vector.load %arg7[%c0_7, %c0_8] : memref<1x64xf32, #tpu.memory_space<vmem>>, vector<1x64xf32>
    %23 = vector.broadcast %22 : vector<1x64xf32> to vector<16x64xf32>
    %24 = arith.addf %21, %23 : vector<16x64xf32>
    %c0_9 = arith.constant 0 : index
    %c0_10 = arith.constant 0 : index
    %25 = vector.load %arg2[%c0_9, %c0_10] : memref<64x128xf32, #tpu.memory_space<vmem>>, vector<64x128xf32>
    %cst_11 = arith.constant dense<0.000000e+00> : vector<16x128xf32>
    %26 = tpu.matmul %24, %25, %cst_11 {dimension_numbers = #tpu.dot_dimension_numbers<[1], [0], [0], [1], [0, 0, 1, 1], [], []>} : vector<16x64xf32>, vector<64x128xf32>, vector<16x128xf32> -> vector<16x128xf32>
    %c0_12 = arith.constant 0 : index
    %c0_13 = arith.constant 0 : index
    %27 = vector.load %arg3[%c0_12, %c0_13] : memref<1x128xf32, #tpu.memory_space<vmem>>, vector<1x128xf32>
    %28 = vector.broadcast %27 : vector<1x128xf32> to vector<16x128xf32>
    %29 = arith.addf %26, %28 : vector<16x128xf32>
    %cst_14 = arith.constant 5.000000e-01 : f32
    %30 = vector.broadcast %cst_14 : f32 to vector<16x128xf32>
    %31 = arith.mulf %30, %29 : vector<16x128xf32>
    %cst_15 = arith.constant 0.707106769 : f32
    %32 = vector.broadcast %cst_15 : f32 to vector<16x128xf32>
    %33 = arith.mulf %29, %32 : vector<16x128xf32>
    %34 = math.erf %33 : vector<16x128xf32>
    %cst_16 = arith.constant 1.000000e+00 : f32
    %35 = vector.broadcast %cst_16 : f32 to vector<16x128xf32>
    %36 = arith.addf %35, %34 : vector<16x128xf32>
    %37 = arith.mulf %31, %36 : vector<16x128xf32>
    %c0_17 = arith.constant 0 : index
    %c0_18 = arith.constant 0 : index
    %38 = vector.load %arg4[%c0_17, %c0_18] : memref<128x64xf32, #tpu.memory_space<vmem>>, vector<128x64xf32>
    %cst_19 = arith.constant dense<0.000000e+00> : vector<16x64xf32>
    %39 = tpu.matmul %37, %38, %cst_19 {dimension_numbers = #tpu.dot_dimension_numbers<[1], [0], [0], [1], [0, 0, 1, 1], [], []>} : vector<16x128xf32>, vector<128x64xf32>, vector<16x64xf32> -> vector<16x64xf32>
    %c0_20 = arith.constant 0 : index
    %c0_21 = arith.constant 0 : index
    %40 = vector.load %arg5[%c0_20, %c0_21] : memref<1x64xf32, #tpu.memory_space<vmem>>, vector<1x64xf32>
    %41 = vector.broadcast %40 : vector<1x64xf32> to vector<16x64xf32>
    %42 = arith.addf %39, %41 : vector<16x64xf32>
    %43 = arith.addf %42, %0 : vector<16x64xf32>
    %c0_22 = arith.constant 0 : index
    %c0_23 = arith.constant 0 : index
    %44 = vector.load %arg8[%c0_22, %c0_23] : memref<16x64xf32, #tpu.memory_space<vmem>>, vector<16x64xf32>
    tpu.vector_store %arg8[%c0_22, %c0_23], %43 {strides = array<i32>} : memref<16x64xf32, #tpu.memory_space<vmem>>, vector<16x64xf32>,
    return
  }
  func.func @transform_0(%arg0: i32) -> (i32, i32) {
    %c0_i32 = arith.constant 0 : i32
    %c0_i32_0 = arith.constant 0 : i32
    return %arg0, %c0_i32 : i32, i32
  }
  func.func @transform_1(%arg0: i32) -> (i32, i32) {
    %c0_i32 = arith.constant 0 : i32
    %c0_i32_0 = arith.constant 0 : i32
    %c0_i32_1 = arith.constant 0 : i32
    return %c0_i32, %c0_i32_0 : i32, i32
  }
  func.func @transform_2(%arg0: i32) -> (i32, i32) {
    %c0_i32 = arith.constant 0 : i32
    %c0_i32_0 = arith.constant 0 : i32
    %c0_i32_1 = arith.constant 0 : i32
    return %c0_i32, %c0_i32_0 : i32, i32
  }
  func.func @transform_3(%arg0: i32) -> (i32, i32) {
    %c0_i32 = arith.constant 0 : i32
    %c0_i32_0 = arith.constant 0 : i32
    %c0_i32_1 = arith.constant 0 : i32
    return %c0_i32, %c0_i32_0 : i32, i32
  }
  func.func @transform_4(%arg0: i32) -> (i32, i32) {
    %c0_i32 = arith.constant 0 : i32
    %c0_i32_0 = arith.constant 0 : i32
    %c0_i32_1 = arith.constant 0 : i32
    return %c0_i32, %c0_i32_0 : i32, i32
  }
  func.func @transform_5(%arg0: i32) -> (i32, i32) {
    %c0_i32 = arith.constant 0 : i32
    %c0_i32_0 = arith.constant 0 : i32
    %c0_i32_1 = arith.constant 0 : i32
    return %c0_i32, %c0_i32_0 : i32, i32
  }
  func.func @transform_6(%arg0: i32) -> (i32, i32) {
    %c0_i32 = arith.constant 0 : i32
    %c0_i32_0 = arith.constant 0 : i32
    %c0_i32_1 = arith.constant 0 : i32
    return %c0_i32, %c0_i32_0 : i32, i32
  }
  func.func @transform_7(%arg0: i32) -> (i32, i32) {
    %c0_i32 = arith.constant 0 : i32
    %c0_i32_0 = arith.constant 0 : i32
    return %arg0, %c0_i32 : i32, i32
  }
}

</mosaic_0001>

<llo_original>
// kernel: tpu_custom_call.1
$region0: #{tpu_custom_call.1}
  #allocation0 [shape = 'u32[]', space=smem, size = 0x4, offset = 0x4, fixed_abs, tag = 'smem constant byte address 0x4 - core index']
  #allocation1 [shape = 'u32[144,128]{1,0:T(1,128)}', space=vmem, size = 0x12000, scoped, tag = 'internal scratch']
  %s0 = inlined_call_operand.vmem [shape: f32[16,64], index: 0, kind: input, shape index: {}]
  %s1 = inlined_call_operand.vmem [shape: f32[64,128], index: 1, kind: input, shape index: {}]
  %s2 = inlined_call_operand.vmem [shape: f32[1,128], index: 2, kind: input, shape index: {}]
  %s3 = inlined_call_operand.vmem [shape: f32[128,64], index: 3, kind: input, shape index: {}]
  %s4 = inlined_call_operand.vmem [shape: f32[1,64], index: 4, kind: input, shape index: {}]
  %s5 = inlined_call_operand.vmem [shape: f32[1,64], index: 5, kind: input, shape index: {}]
  %s6 = inlined_call_operand.vmem [shape: f32[1,64], index: 6, kind: input, shape index: {}]
  %s7 = inlined_call_operand.hbm [shape: f32[16,64], index: 7, kind: output, shape index: {}]
  %s8 = sld [smem:[#allocation0]]
  $region38: #{tpu_custom_call.1} parent=0
    _
  %s10 = ssub.s32 1, %s8
  %s11 = scalar_select 0, %s10, %s8
  $region1: #{tpu_custom_call.1} parent=0
    #allocation2 [shape = 'u8[8192]{0}', space=vmem, size = 0x2000, scoped, tag = 'output window, operand 0, single buffered']
    #allocation3 [shape = 's32[1]{0}', space=sflag, size = 0x4, scoped, tag = 'scoped memory for tpu_custom_call.1']
    %12 = vsyncpa [#allocation3], 0
    // Predicated region
    $region2: #{tpu_custom_call.1} parent=1 // pred_check
      _
    $region3: #{tpu_custom_call.1} parent=1 // pred_check_branch
      %14 = sbr.rel (0) target = $region5
    $region4: #{tpu_custom_call.1} parent=1 // pred_region
      _
    $region5: #{tpu_custom_call.1} parent=1 // pred_fallthru
      _
    // Predicated region
    $region6: #{tpu_custom_call.1} parent=1 // pred_check
      _
    $region7: #{tpu_custom_call.1} parent=1 // pred_check_branch
      %16 = sbr.rel (0) target = $region9
    $region8: #{tpu_custom_call.1} parent=1 // pred_region
      _
    $region9: #{tpu_custom_call.1} parent=1 // pred_fallthru
      _
    // Predicated region
    $region10: #{tpu_custom_call.1} parent=1 // pred_check
      _
    $region11: #{tpu_custom_call.1} parent=1 // pred_check_branch
      %18 = sbr.rel (0) target = $region13
    $region12: #{tpu_custom_call.1} parent=1 // pred_region
      _
    $region13: #{tpu_custom_call.1} parent=1 // pred_fallthru
      _
    // Predicated region
    $region14: #{tpu_custom_call.1} parent=1 // pred_check
      _
    $region15: #{tpu_custom_call.1} parent=1 // pred_check_branch
      %20 = sbr.rel (0) target = $region17
    $region16: #{tpu_custom_call.1} parent=1 // pred_region
      _
    $region17: #{tpu_custom_call.1} parent=1 // pred_fallthru
      _
    // Predicated region
    $region18: #{tpu_custom_call.1} parent=1 // pred_check
      _
    $region19: #{tpu_custom_call.1} parent=1 // pred_check_branch
      %22 = sbr.rel (0) target = $region21
    $region20: #{tpu_custom_call.1} parent=1 // pred_region
      _
    $region21: #{tpu_custom_call.1} parent=1 // pred_fallthru
      _
    // Predicated region
    $region22: #{tpu_custom_call.1} parent=1 // pred_check
      _
    $region23: #{tpu_custom_call.1} parent=1 // pred_check_branch
      %24 = sbr.rel (0) target = $region25
    $region24: #{tpu_custom_call.1} parent=1 // pred_region
      _
    $region25: #{tpu_custom_call.1} parent=1 // pred_fallthru
      _
    // Predicated region
    $region26: #{tpu_custom_call.1} parent=1 // pred_check
      _
    $region27: #{tpu_custom_call.1} parent=1 // pred_check_branch
      %26 = sbr.rel (0) target = $region29
    $region28: #{tpu_custom_call.1} parent=1 // pred_region
      _
    $region29: #{tpu_custom_call.1} parent=1 // pred_fallthru
      _
    %v27 = vld [vmem:[%s0] sm:$0xff]
    %v28 = vld [vmem:[%s0 + $0x8] sm:$0xff]
    %vm29 = vcmask 523264
    %v30 = vsel %vm29, %v27, 0.0
    %31 = vadd.xlane.f32.xlu0 %v30
    %v32 = vpop.xlane.xlu0 %31
    %v33 = vsel %vm29, %v28, 0.0
    %34 = vadd.xlane.f32.xlu0 %v33
    %v35 = vpop.xlane.xlu0 %34
    %v36 = vrcp.pop 64.0
    %v37 = vmul.f32 %v32, %v36
    %v38 = vmul.f32 %v35, %v36
    %v39 = vsub.f32 %v27, %v37
    %v40 = vsub.f32 %v28, %v38
    %v41 = vmul.f32 %v39, %v39
    %v42 = vmul.f32 %v40, %v40
    %v43 = vsel %vm29, %v41, 0.0
    %44 = vadd.xlane.f32.xlu0 %v43
    %v45 = vpop.xlane.xlu0 %44
    %v46 = vsel %vm29, %v42, 0.0
    %47 = vadd.xlane.f32.xlu0 %v46
    %v48 = vpop.xlane.xlu0 %47
    %v49 = vmul.f32 %v45, %v36
    %v50 = vmul.f32 %v48, %v36
    %v51 = vadd.f32 %v49, 1e-05
    %v52 = vadd.f32 %v50, 1e-05
    %v53 = vrsqrt.pop %v51
    %v54 = vrsqrt.pop %v52
    %v55 = vmul.f32 %v39, %v53
    %v56 = vmul.f32 %v40, %v54
    %v57 = vld [vmem:[%s5] sm:$0x1]
    %v59 = vlaneseq
    %v60 = vshrl.u32 %v59, 7
    %v61 = vsub.s32 0, %v60
    %v62 = vrot.slane %v57, %v61
    %v64 = vmul.f32 %v55, %v62
    %v65 = vmul.f32 %v56, %v62
    %v66 = vld [vmem:[%s6] sm:$0x1]
    %v68 = vlaneseq
    %v69 = vshrl.u32 %v68, 7
    %v70 = vsub.s32 0, %v69
    %v71 = vrot.slane %v66, %v70
    %v73 = vadd.f32 %v64, %v71
    %v74 = vadd.f32 %v65, %v71
    %v75 = vld [vmem:[%s1] sm:$0xff]
    %v76 = vld [vmem:[%s1 + $0x8] sm:$0xff]
    %v77 = vld [vmem:[%s1 + $0x10] sm:$0xff]
    %v78 = vld [vmem:[%s1 + $0x18] sm:$0xff]
    %v79 = vld [vmem:[%s1 + $0x20] sm:$0xff]
    %v80 = vld [vmem:[%s1 + $0x28] sm:$0xff]
    %v81 = vld [vmem:[%s1 + $0x30] sm:$0xff]
    %v82 = vld [vmem:[%s1 + $0x38] sm:$0xff]
    %v83 = vld [vmem:[%s2] sm:$0x1]
    %v85 = vlaneseq
    %v86 = vshrl.u32 %v85, 7
    %v87 = vsub.s32 0, %v86
    %v88 = vrot.slane %v83, %v87
    %v91 = vsel %vm29, %v73, 0
    %v94 = vsel %vm29, %v74, 0
    %96 = vmatprep.subr.mxu0 0.0
    %97 = vmatpush1.msra.mxu0 %v75
    %98 = vmatprep.subr.mxu0 0.0
    %99 = vmatpush1.msra.mxu0 %v76
    %100 = vmatprep.subr.mxu0 0.0
    %101 = vmatpush1.msra.mxu0 %v77
    %102 = vmatprep.subr.mxu0 0.0
    %103 = vmatpush1.msra.mxu0 %v78
    %104 = vmatprep.subr.mxu0 0.0
    %105 = vmatpush1.msra.mxu0 %v79
    %106 = vmatprep.subr.mxu0 0.0
    %107 = vmatpush1.msra.mxu0 %v80
    %108 = vmatprep.subr.mxu0 0.0
    %109 = vmatpush1.msra.mxu0 %v81
    %110 = vmatprep.subr.mxu0 0.0
    %111 = vmatpush1.msra.mxu0 %v82
    %112 = vmatprep.subr.mxu0 0.0
    %113 = vmatpush1.msra.mxu0 0.0
    %114 = vmatprep.subr.mxu0 0.0
    %115 = vmatpush1.msra.mxu0 0.0
    %116 = vmatprep.subr.mxu0 0.0
    %117 = vmatpush1.msra.mxu0 0.0
    %118 = vmatprep.subr.mxu0 0.0
    %119 = vmatpush1.msra.mxu0 0.0
    %120 = vmatprep.subr.mxu0 0.0
    %121 = vmatpush1.msra.mxu0 0.0
    %122 = vmatprep.subr.mxu0 0.0
    %123 = vmatpush1.msra.mxu0 0.0
    %124 = vmatprep.subr.mxu0 0.0
    %125 = vmatpush1.msra.mxu0 0.0
    %126 = vmatprep.subr.mxu0 0.0
    %127 = vmatpush1.msra.mxu0 0.0
    %128 = vmatprep.subr.mxu0 0.0
    %129 = vmatpush1.msra.mxu0 0.0
    %130 = vmatprep.subr.mxu0 0.0
    %131 = vmatpush1.msra.mxu0 0.0
    %132 = vmatprep.subr.mxu0 0.0
    %133 = vmatpush1.msra.mxu0 0.0
    %134 = vmatprep.subr.mxu0 0.0
    %135 = vmatpush1.msra.mxu0 0.0
    %136 = vmatprep.subr.mxu0 0.0
    %137 = vmatpush1.msra.mxu0 0.0
    %138 = vmatprep.subr.mxu0 0.0
    %139 = vmatpush1.msra.mxu0 0.0
    %140 = vmatprep.subr.mxu0 0.0
    %141 = vmatpush1.msra.mxu0 0.0
    %142 = vmatprep.subr.mxu0 0.0
    %143 = vmatpush1.msra.mxu0 0.0
    %144 = vmatprep.subr.mxu0 0.0
    %145 = vmatpush1.msra.mxu0 0.0
    %146 = vmatprep.subr.mxu0 0.0
    %147 = vmatpush1.msra.mxu0 0.0
    %148 = vmatprep.subr.mxu0 0.0
    %149 = vmatpush1.msra.mxu0 0.0
    %150 = vmatprep.subr.mxu0 0.0
    %151 = vmatpush1.msra.mxu0 0.0
    %152 = vmatprep.subr.mxu0 0.0
    %153 = vmatpush1.msra.mxu0 0.0
    %154 = vmatprep.subr.mxu0 0.0
    %155 = vmatpush1.msra.mxu0 0.0
    %156 = vmatprep.subr.mxu0 0.0
    %157 = vmatpush1.msra.mxu0 0.0
    %158 = vmatprep.subr.mxu0 0.0
    %159 = vmatpush1.msra.mxu0 0.0
    %160 = vmatprep.mubr.f32.mxu0 0.0
    %161 = vmatmul.mubr.f32.gmra.mrb[0].mxu0 %v91
    %v162 = vpop.f32.mrb[0].mxu0
    %v163 = vadd.f32 %v88, %v162
    %v164 = vpop.f32.mrb[0].mxu0
    %165 = vmatprep.mubr.f32.mxu0 0.0
    %166 = vmatmul.mubr.f32.gmra.mrb[0].mxu0 %v94
    %v167 = vpop.f32.mrb[0].mxu0
    %v168 = vadd.f32 %v88, %v167
    %v169 = vpop.f32.mrb[0].mxu0
    %170 = vdwg.mxu0
    %v171 = vmul.f32 %v163, 0.5
    %v172 = vmul.f32 %v168, 0.5
    %v173 = vmul.f32 %v163, 0.70710677
    %v174 = vmul.f32 %v168, 0.70710677
    %v175 = verf.f32.pop %v173
    %v176 = verf.f32.pop %v174
    %v177 = vadd.f32 %v175, 1.0
    %v178 = vadd.f32 %v176, 1.0
    %v179 = vmul.f32 %v171, %v177
    %v180 = vmul.f32 %v172, %v178
    %v181 = vld [vmem:[%s3] sm:$0xff]
    %v182 = vld [vmem:[%s3 + $0x8] sm:$0xff]
    %v183 = vld [vmem:[%s3 + $0x10] sm:$0xff]
    %v184 = vld [vmem:[%s3 + $0x18] sm:$0xff]
    %v185 = vld [vmem:[%s3 + $0x20] sm:$0xff]
    %v186 = vld [vmem:[%s3 + $0x28] sm:$0xff]
    %v187 = vld [vmem:[%s3 + $0x30] sm:$0xff]
    %v188 = vld [vmem:[%s3 + $0x38] sm:$0xff]
    %v189 = vld [vmem:[%s3 + $0x40] sm:$0xff]
    %v190 = vld [vmem:[%s3 + $0x48] sm:$0xff]
    %v191 = vld [vmem:[%s3 + $0x50] sm:$0xff]
    %v192 = vld [vmem:[%s3 + $0x58] sm:$0xff]
    %v193 = vld [vmem:[%s3 + $0x60] sm:$0xff]
    %v194 = vld [vmem:[%s3 + $0x68] sm:$0xff]
    %v195 = vld [vmem:[%s3 + $0x70] sm:$0xff]
    %v196 = vld [vmem:[%s3 + $0x78] sm:$0xff]
    %v197 = vld [vmem:[%s4] sm:$0x1]
    %v199 = vlaneseq
    %v200 = vshrl.u32 %v199, 7
    %v201 = vsub.s32 0, %v200
    %v202 = vrot.slane %v197, %v201
    %204 = vmatprep.subr.mxu0 0.0
    %205 = vmatpush1.msra.mxu0 %v181
    %206 = vmatprep.subr.mxu0 0.0
    %207 = vmatpush1.msra.mxu0 %v182
    %208 = vmatprep.subr.mxu0 0.0
    %209 = vmatpush1.msra.mxu0 %v183
    %210 = vmatprep.subr.mxu0 0.0
    %211 = vmatpush1.msra.mxu0 %v184
    %212 = vmatprep.subr.mxu0 0.0
    %213 = vmatpush1.msra.mxu0 %v185
    %214 = vmatprep.subr.mxu0 0.0
    %215 = vmatpush1.msra.mxu0 %v186
    %216 = vmatprep.subr.mxu0 0.0
    %217 = vmatpush1.msra.mxu0 %v187
    %218 = vmatprep.subr.mxu0 0.0
    %219 = vmatpush1.msra.mxu0 %v188
    %220 = vmatprep.subr.mxu0 0.0
    %221 = vmatpush1.msra.mxu0 %v189
    %222 = vmatprep.subr.mxu0 0.0
    %223 = vmatpush1.msra.mxu0 %v190
    %224 = vmatprep.subr.mxu0 0.0
    %225 = vmatpush1.msra.mxu0 %v191
    %226 = vmatprep.subr.mxu0 0.0
    %227 = vmatpush1.msra.mxu0 %v192
    %228 = vmatprep.subr.mxu0 0.0
    %229 = vmatpush1.msra.mxu0 %v193
    %230 = vmatprep.subr.mxu0 0.0
    %231 = vmatpush1.msra.mxu0 %v194
    %232 = vmatprep.subr.mxu0 0.0
    %233 = vmatpush1.msra.mxu0 %v195
    %234 = vmatprep.subr.mxu0 0.0
    %235 = vmatpush1.msra.mxu0 %v196
    %236 = vmatprep.subr.mxu0 0.0
    %237 = vmatpush1.msra.mxu0 0.0
    %238 = vmatprep.subr.mxu0 0.0
    %239 = vmatpush1.msra.mxu0 0.0
    %240 = vmatprep.subr.mxu0 0.0
    %241 = vmatpush1.msra.mxu0 0.0
    %242 = vmatprep.subr.mxu0 0.0
    %243 = vmatpush1.msra.mxu0 0.0
    %244 = vmatprep.subr.mxu0 0.0
    %245 = vmatpush1.msra.mxu0 0.0
    %246 = vmatprep.subr.mxu0 0.0
    %247 = vmatpush1.msra.mxu0 0.0
    %248 = vmatprep.subr.mxu0 0.0
    %249 = vmatpush1.msra.mxu0 0.0
    %250 = vmatprep.subr.mxu0 0.0
    %251 = vmatpush1.msra.mxu0 0.0
    %252 = vmatprep.subr.mxu0 0.0
    %253 = vmatpush1.msra.mxu0 0.0
    %254 = vmatprep.subr.mxu0 0.0
    %255 = vmatpush1.msra.mxu0 0.0
    %256 = vmatprep.subr.mxu0 0.0
    %257 = vmatpush1.msra.mxu0 0.0
    %258 = vmatprep.subr.mxu0 0.0
    %259 = vmatpush1.msra.mxu0 0.0
    %260 = vmatprep.subr.mxu0 0.0
    %261 = vmatpush1.msra.mxu0 0.0
    %262 = vmatprep.subr.mxu0 0.0
    %263 = vmatpush1.msra.mxu0 0.0
    %264 = vmatprep.subr.mxu0 0.0
    %265 = vmatpush1.msra.mxu0 0.0
    %266 = vmatprep.subr.mxu0 0.0
    %267 = vmatpush1.msra.mxu0 0.0
    %268 = vmatprep.mubr.f32.mxu0 0.0
    %269 = vmatmul.mubr.f32.gmra.mrb[0].mxu0 %v179
    %v270 = vpop.f32.mrb[0].mxu0
    %v271 = vadd.f32 %v202, %v270
    %v272 = vpop.f32.mrb[0].mxu0
    %273 = vmatprep.mubr.f32.mxu0 0.0
    %274 = vmatmul.mubr.f32.gmra.mrb[0].mxu0 %v180
    %v275 = vpop.f32.mrb[0].mxu0
    %v276 = vadd.f32 %v202, %v275
    %v277 = vpop.f32.mrb[0].mxu0
    %278 = vdwg.mxu0
    %v279 = vadd.f32 %v271, %v27
    %v280 = vadd.f32 %v276, %v28
    %281 = vst.msk [vmem:[#allocation2] sm:$0xff] %vm29, %v279
    %282 = vst.msk [vmem:[#allocation2 + $0x8] sm:$0xff] %vm29, %v280
    // Predicated region
    $region30: #{tpu_custom_call.1} parent=1 // pred_check
      _
    $region31: #{tpu_custom_call.1} parent=1 // pred_check_branch
      %284 = sbr.rel (0) target = $region33
    $region32: #{tpu_custom_call.1} parent=1 // pred_region
      %s286 = ssub.s32 256, 256
      %287 = vsyncadd [#allocation3], %s286
      %s288 = sshll.u32 [#allocation2], 4
      %s289 = int_to_ptr.vmem [resolvable:$true] %s288
      %294 = dma.vmem_to_hbm [thread:$0]  %s289, 256, %s7, [#allocation3], 128, 128, 8
    $region33: #{tpu_custom_call.1} parent=1 // pred_fallthru
      _
    // Predicated region
    $region34: #{tpu_custom_call.1} parent=1 // pred_check
      _
    $region35: #{tpu_custom_call.1} parent=1 // pred_check_branch
      %296 = sbr.rel (0) target = $region37
    $region36: #{tpu_custom_call.1} parent=1 // pred_region
      %297 = dma.done [#allocation3], 256
    $region37: #{tpu_custom_call.1} parent=1 // pred_fallthru
      _
    %298 = vsyncpa [#allocation3], 1

</llo_original>
